<compile_context>
chip_gen: v7x
topology: tpu7x:2x2x1
jax: 0.10.0
libtpu: 0.0.40
codegen_flags: <defaults>
</compile_context>

<pallas_src>
import jax
import jax.numpy as jnp
from jax.experimental import pallas as pl
from jax.experimental.pallas import tpu as pltpu

_LANE = 128      # lane width: last dim of every tile padded to a multiple of this
_SUBLANE = 8     # sublane granularity for the batch (second-to-last) dim


def _round_up(n, m):
    return ((n + m - 1) // m) * m


def _pad2(a, shape):
    pads = [(0, t - s) for s, t in zip(a.shape, shape)]
    if all(p == (0, 0) for p in pads):
        return a
    return jnp.pad(a, pads)


def _vmem_budget_bytes():
    """3/4 of physical per-core VMEM (conservative if the query fails)."""
    phys = 64 * 1024 * 1024  # v7x per-TC VMEM; safe lower bound for all gens
    try:
        info = pltpu.get_tpu_info()
        phys = int(getattr(info, "vmem_capacity_bytes", phys))
    except Exception:
        pass
    return (phys * 3) // 4


def _pick_batch_tile(B, Fp, Hp, Op, batch_tile, vmem_budget, weight_bytes):
    resident = (Fp * Hp + Hp * Op) * weight_bytes + (Hp + Op) * 4
    if resident > vmem_budget // 2:
        # TODO(synk): add a K/N-tiled fallback (grid over Hp/Op with an f32
        # accumulator scratch + pl.when init/finalize) for MLPs whose weights
        # exceed ~half of VMEM; the current design keeps both weights resident.
        raise NotImplementedError(
            "hidden/feature dims too large for VMEM-resident weights")
    # Rough per-batch-row VMEM working set: double-buffered x & out tiles (f32)
    # + one f32 hidden row + bf16 casts of x and h.
    per_row = 2 * (Fp + Op) * 4 + Hp * 4 + (Fp + Hp) * 2
    cap = ((vmem_budget - resident) * 4 // 5) // per_row
    tb = min(_round_up(batch_tile, 256), _round_up(B, _SUBLANE),
             max(cap, _SUBLANE))
    if B >= 512:
        # Keep at least 2 batch tiles so the parallel grid can shard across
        # both TensorCores on v7x.
        tb = min(tb, _round_up(pl.cdiv(B, 2), 256))
    if tb >= 256:
        tb = (tb // 256) * 256        # keep the 256x256 MXU full on v6e/v7x
    else:
        tb = max(_SUBLANE, (tb // _SUBLANE) * _SUBLANE)
    return tb


def mlp_kernel(x_ref, w1_ref, b1_ref, w2_ref, b2_ref, o_ref):
    # hidden = tanh(x @ W1 + b1); out = hidden @ W2 + b2
    x = x_ref[...].astype(w1_ref.dtype)        # bf16 (or f32) for the MXU fast path
    h = jnp.dot(x, w1_ref[...], preferred_element_type=jnp.float32)
    h = jnp.tanh(h + b1_ref[...])              # f32 elementwise (v5e-safe)
    y = jnp.dot(h.astype(w2_ref.dtype), w2_ref[...],
                preferred_element_type=jnp.float32)
    o_ref[...] = (y + b2_ref[...]).astype(o_ref.dtype)


def prepare_params(w_hidden, b_hidden, w_output, b_output, *,
                   matmul_dtype=jnp.bfloat16):
    """One-time parameter prep: transpose to [in, out], pad to 128-multiples, cast.

    torch.nn.Linear stores W as [out, in]; zero-padding is exact (padded x
    columns hit zero W1 rows, padded hidden columns are tanh(0)=0 * zero W2
    rows, padded output columns are sliced off after the call).
    """
    H, F = w_hidden.shape
    O = w_output.shape[0]
    Fp, Hp, Op = _round_up(F, _LANE), _round_up(H, _LANE), _round_up(O, _LANE)
    w1p = _pad2(jnp.asarray(w_hidden, jnp.float32).T, (Fp, Hp)).astype(matmul_dtype)
    b1p = _pad2(jnp.asarray(b_hidden, jnp.float32).reshape(1, H), (1, Hp))
    w2p = _pad2(jnp.asarray(w_output, jnp.float32).T, (Hp, Op)).astype(matmul_dtype)
    b2p = _pad2(jnp.asarray(b_output, jnp.float32).reshape(1, O), (1, Op))
    return (w1p, b1p, w2p, b2p, O)


def _weight_spec(shape, buffered):
    if buffered:
        # Constant block: single-buffer it so it doesn't cost 2x VMEM.
        return pl.BlockSpec(shape, lambda i: (0, 0), pipeline_mode=pl.Buffered(1))
    return pl.BlockSpec(shape, lambda i: (0, 0))


def mlp_forward(x, params, *, batch_tile=512):
    """Forward pass of Net.  x: [B, F] float32, params from prepare_params."""
    w1p, b1p, w2p, b2p, n_output = params
    B, F = x.shape
    Fp, Hp = w1p.shape
    Op = w2p.shape[1]
    assert Fp == _round_up(F, _LANE), "params were prepared for a different F"

    vmem_budget = _vmem_budget_bytes()
    TB = _pick_batch_tile(B, Fp, Hp, Op, batch_tile, vmem_budget,
                          jnp.dtype(w1p.dtype).itemsize)

    # Only the feature dim of x is padded (lane density); no batch pad.
    xp = x if F == Fp else jnp.pad(x, ((0, 0), (0, Fp - F)))

    def _run(buffered_weights):
        return pl.pallas_call(
            mlp_kernel,
            out_shape=jax.ShapeDtypeStruct((B, Op), jnp.float32),
            grid=(pl.cdiv(B, TB),),
            in_specs=[
                pl.BlockSpec((TB, Fp), lambda i: (i, 0)),     # x: pipelined over batch
                _weight_spec((Fp, Hp), buffered_weights),     # W1: VMEM-resident
                _weight_spec((1, Hp), buffered_weights),      # b1
                _weight_spec((Hp, Op), buffered_weights),     # W2: VMEM-resident
                _weight_spec((1, Op), buffered_weights),      # b2
            ],
            out_specs=pl.BlockSpec((TB, Op), lambda i: (i, 0)),
            compiler_params=pltpu.CompilerParams(
                dimension_semantics=("parallel",),            # batch shards across TCs
                vmem_limit_bytes=int(vmem_budget),
            ),
        )(xp, w1p, b1p, w2p, b2p)

    try:
        out = _run(buffered_weights=True)
    except Exception:
        # pl.Buffered(1) unsupported on this jax version's TPU lowering:
        # fall back to default double-buffering (correctness unaffected).
        out = _run(buffered_weights=False)

    return out[:, :n_output]


if __name__ == "__main__":
    # Shapes implied by Net(n_feature, n_hidden, n_output); kept small.
    batch, n_feature, n_hidden, n_output = 8, 16, 32, 4

    key = jax.random.PRNGKey(0)
    kx, k1, k2, k3, k4 = jax.random.split(key, 5)

    x = jax.random.normal(kx, (batch, n_feature), dtype=jnp.float32)

    # torch.nn.Linear stores W as [out, in]; initialize in that layout.
    w_hidden = jax.random.normal(k1, (n_hidden, n_feature), dtype=jnp.float32) * 0.1
    b_hidden = jax.random.normal(k2, (n_hidden,), dtype=jnp.float32) * 0.1
    w_output = jax.random.normal(k3, (n_output, n_hidden), dtype=jnp.float32) * 0.1
    b_output = jax.random.normal(k4, (n_output,), dtype=jnp.float32) * 0.1

    # Pure-JAX reference of the same forward pass.
    ref = jnp.tanh(x @ w_hidden.T + b_hidden) @ w_output.T + b_output

    # Fast path: bf16 matmul inputs, f32 accumulation (default).
    params_bf16 = prepare_params(w_hidden, b_hidden, w_output, b_output)
    out = jax.block_until_ready(mlp_forward(x, params_bf16))
    assert out.shape == (batch, n_output)
    assert jnp.allclose(out, ref, atol=2e-2, rtol=2e-2)

    # Exact path: f32 end-to-end, tight against the reference.
    params_f32 = prepare_params(w_hidden, b_hidden, w_output, b_output,
                                matmul_dtype=jnp.float32)
    out_f32 = jax.block_until_ready(mlp_forward(x, params_f32))
    assert jnp.allclose(out_f32, ref, atol=1e-5, rtol=1e-5)

    print("KERNEL_OK")
</pallas_src>

<mosaic_0001>
module attributes {stable_mosaic.version = 11 : i64} {
  func.func @mlp_kernel(%arg0: i32, %arg1: memref<8x128xf32, #tpu.memory_space<vmem>>, %arg2: memref<128x128xbf16, #tpu.memory_space<vmem>>, %arg3: memref<1x128xf32, #tpu.memory_space<vmem>>, %arg4: memref<128x128xbf16, #tpu.memory_space<vmem>>, %arg5: memref<1x128xf32, #tpu.memory_space<vmem>>, %arg6: memref<8x128xf32, #tpu.memory_space<vmem>>) attributes {dimension_semantics = [#tpu.dimension_semantics<parallel>], iteration_bounds = array<i64: 1>, scalar_prefetch = 0 : i64, scratch_operands = 0 : i64, tpu.core_type = #tpu.core_type<tc>, window_params = [{transform_indices = @transform_0, window_bounds = array<i64: 8, 128>}, {pipeline_mode = #tpu.pipeline_mode<synchronous>, transform_indices = @transform_1, window_bounds = array<i64: 128, 128>}, {pipeline_mode = #tpu.pipeline_mode<synchronous>, transform_indices = @transform_2, window_bounds = array<i64: 1, 128>}, {pipeline_mode = #tpu.pipeline_mode<synchronous>, transform_indices = @transform_3, window_bounds = array<i64: 128, 128>}, {pipeline_mode = #tpu.pipeline_mode<synchronous>, transform_indices = @transform_4, window_bounds = array<i64: 1, 128>}, {transform_indices = @transform_5, window_bounds = array<i64: 8, 128>}]} {
    %c0 = arith.constant 0 : index
    %c0_0 = arith.constant 0 : index
    %0 = vector.load %arg1[%c0, %c0_0] : memref<8x128xf32, #tpu.memory_space<vmem>>, vector<8x128xf32>
    %1 = arith.truncf %0 : vector<8x128xf32> to vector<8x128xbf16>
    %c0_1 = arith.constant 0 : index
    %c0_2 = arith.constant 0 : index
    %2 = vector.load %arg2[%c0_1, %c0_2] : memref<128x128xbf16, #tpu.memory_space<vmem>>, vector<128x128xbf16>
    %cst = arith.constant dense<0.000000e+00> : vector<8x128xf32>
    %3 = tpu.matmul %1, %2, %cst {dimension_numbers = #tpu.dot_dimension_numbers<[1], [0], [0], [1], [0, 0, 1, 1], [], []>} : vector<8x128xbf16>, vector<128x128xbf16>, vector<8x128xf32> -> vector<8x128xf32>
    %c0_3 = arith.constant 0 : index
    %c0_4 = arith.constant 0 : index
    %4 = vector.load %arg3[%c0_3, %c0_4] : memref<1x128xf32, #tpu.memory_space<vmem>>, vector<1x128xf32>
    %5 = vector.broadcast %4 : vector<1x128xf32> to vector<8x128xf32>
    %6 = arith.addf %3, %5 : vector<8x128xf32>
    %7 = math.tanh %6 : vector<8x128xf32>
    %8 = arith.truncf %7 : vector<8x128xf32> to vector<8x128xbf16>
    %c0_5 = arith.constant 0 : index
    %c0_6 = arith.constant 0 : index
    %9 = vector.load %arg4[%c0_5, %c0_6] : memref<128x128xbf16, #tpu.memory_space<vmem>>, vector<128x128xbf16>
    %cst_7 = arith.constant dense<0.000000e+00> : vector<8x128xf32>
    %10 = tpu.matmul %8, %9, %cst_7 {dimension_numbers = #tpu.dot_dimension_numbers<[1], [0], [0], [1], [0, 0, 1, 1], [], []>} : vector<8x128xbf16>, vector<128x128xbf16>, vector<8x128xf32> -> vector<8x128xf32>
    %c0_8 = arith.constant 0 : index
    %c0_9 = arith.constant 0 : index
    %11 = vector.load %arg5[%c0_8, %c0_9] : memref<1x128xf32, #tpu.memory_space<vmem>>, vector<1x128xf32>
    %12 = vector.broadcast %11 : vector<1x128xf32> to vector<8x128xf32>
    %13 = arith.addf %10, %12 : vector<8x128xf32>
    %c0_10 = arith.constant 0 : index
    %c0_11 = arith.constant 0 : index
    %14 = vector.load %arg6[%c0_10, %c0_11] : memref<8x128xf32, #tpu.memory_space<vmem>>, vector<8x128xf32>
    tpu.vector_store %arg6[%c0_10, %c0_11], %13 {strides = array<i32>} : memref<8x128xf32, #tpu.memory_space<vmem>>, vector<8x128xf32>,
    return
  }
  func.func @transform_0(%arg0: i32) -> (i32, i32) {
    %c0_i32 = arith.constant 0 : i32
    %c0_i32_0 = arith.constant 0 : i32
    return %arg0, %c0_i32 : i32, i32
  }
  func.func @transform_1(%arg0: i32) -> (i32, i32) {
    %c0_i32 = arith.constant 0 : i32
    %c0_i32_0 = arith.constant 0 : i32
    %c0_i32_1 = arith.constant 0 : i32
    return %c0_i32, %c0_i32_0 : i32, i32
  }
  func.func @transform_2(%arg0: i32) -> (i32, i32) {
    %c0_i32 = arith.constant 0 : i32
    %c0_i32_0 = arith.constant 0 : i32
    %c0_i32_1 = arith.constant 0 : i32
    return %c0_i32, %c0_i32_0 : i32, i32
  }
  func.func @transform_3(%arg0: i32) -> (i32, i32) {
    %c0_i32 = arith.constant 0 : i32
    %c0_i32_0 = arith.constant 0 : i32
    %c0_i32_1 = arith.constant 0 : i32
    return %c0_i32, %c0_i32_0 : i32, i32
  }
  func.func @transform_4(%arg0: i32) -> (i32, i32) {
    %c0_i32 = arith.constant 0 : i32
    %c0_i32_0 = arith.constant 0 : i32
    %c0_i32_1 = arith.constant 0 : i32
    return %c0_i32, %c0_i32_0 : i32, i32
  }
  func.func @transform_5(%arg0: i32) -> (i32, i32) {
    %c0_i32 = arith.constant 0 : i32
    %c0_i32_0 = arith.constant 0 : i32
    return %arg0, %c0_i32 : i32, i32
  }
}

module attributes {stable_mosaic.version = 11 : i64} {
  func.func @mlp_kernel(%arg0: i32, %arg1: memref<8x128xf32, #tpu.memory_space<vmem>>, %arg2: memref<128x128xbf16, #tpu.memory_space<vmem>>, %arg3: memref<1x128xf32, #tpu.memory_space<vmem>>, %arg4: memref<128x128xbf16, #tpu.memory_space<vmem>>, %arg5: memref<1x128xf32, #tpu.memory_space<vmem>>, %arg6: memref<8x128xf32, #tpu.memory_space<vmem>>) attributes {dimension_semantics = [#tpu.dimension_semantics<parallel>], iteration_bounds = array<i64: 1>, scalar_prefetch = 0 : i64, scratch_operands = 0 : i64, tpu.core_type = #tpu.core_type<tc>, window_params = [{transform_indices = @transform_0, window_bounds = array<i64: 8, 128>}, {pipeline_mode = #tpu.pipeline_mode<synchronous>, transform_indices = @transform_1, window_bounds = array<i64: 128, 128>}, {pipeline_mode = #tpu.pipeline_mode<synchronous>, transform_indices = @transform_2, window_bounds = array<i64: 1, 128>}, {pipeline_mode = #tpu.pipeline_mode<synchronous>, transform_indices = @transform_3, window_bounds = array<i64: 128, 128>}, {pipeline_mode = #tpu.pipeline_mode<synchronous>, transform_indices = @transform_4, window_bounds = array<i64: 1, 128>}, {transform_indices = @transform_5, window_bounds = array<i64: 8, 128>}]} {
    %c0 = arith.constant 0 : index
    %c0_0 = arith.constant 0 : index
    %0 = vector.load %arg1[%c0, %c0_0] : memref<8x128xf32, #tpu.memory_space<vmem>>, vector<8x128xf32>
    %1 = arith.truncf %0 : vector<8x128xf32> to vector<8x128xbf16>
    %c0_1 = arith.constant 0 : index
    %c0_2 = arith.constant 0 : index
    %2 = vector.load %arg2[%c0_1, %c0_2] : memref<128x128xbf16, #tpu.memory_space<vmem>>, vector<128x128xbf16>
    %cst = arith.constant dense<0.000000e+00> : vector<8x128xf32>
    %3 = tpu.matmul %1, %2, %cst {dimension_numbers = #tpu.dot_dimension_numbers<[1], [0], [0], [1], [0, 0, 1, 1], [], []>} : vector<8x128xbf16>, vector<128x128xbf16>, vector<8x128xf32> -> vector<8x128xf32>
    %c0_3 = arith.constant 0 : index
    %c0_4 = arith.constant 0 : index
    %4 = vector.load %arg3[%c0_3, %c0_4] : memref<1x128xf32, #tpu.memory_space<vmem>>, vector<1x128xf32>
    %5 = vector.broadcast %4 : vector<1x128xf32> to vector<8x128xf32>
    %6 = arith.addf %3, %5 : vector<8x128xf32>
    %7 = math.tanh %6 : vector<8x128xf32>
    %8 = arith.truncf %7 : vector<8x128xf32> to vector<8x128xbf16>
    %c0_5 = arith.constant 0 : index
    %c0_6 = arith.constant 0 : index
    %9 = vector.load %arg4[%c0_5, %c0_6] : memref<128x128xbf16, #tpu.memory_space<vmem>>, vector<128x128xbf16>
    %cst_7 = arith.constant dense<0.000000e+00> : vector<8x128xf32>
    %10 = tpu.matmul %8, %9, %cst_7 {dimension_numbers = #tpu.dot_dimension_numbers<[1], [0], [0], [1], [0, 0, 1, 1], [], []>} : vector<8x128xbf16>, vector<128x128xbf16>, vector<8x128xf32> -> vector<8x128xf32>
    %c0_8 = arith.constant 0 : index
    %c0_9 = arith.constant 0 : index
    %11 = vector.load %arg5[%c0_8, %c0_9] : memref<1x128xf32, #tpu.memory_space<vmem>>, vector<1x128xf32>
    %12 = vector.broadcast %11 : vector<1x128xf32> to vector<8x128xf32>
    %13 = arith.addf %10, %12 : vector<8x128xf32>
    %c0_10 = arith.constant 0 : index
    %c0_11 = arith.constant 0 : index
    %14 = vector.load %arg6[%c0_10, %c0_11] : memref<8x128xf32, #tpu.memory_space<vmem>>, vector<8x128xf32>
    tpu.vector_store %arg6[%c0_10, %c0_11], %13 {strides = array<i32>} : memref<8x128xf32, #tpu.memory_space<vmem>>, vector<8x128xf32>,
    return
  }
  func.func @transform_0(%arg0: i32) -> (i32, i32) {
    %c0_i32 = arith.constant 0 : i32
    %c0_i32_0 = arith.constant 0 : i32
    return %arg0, %c0_i32 : i32, i32
  }
  func.func @transform_1(%arg0: i32) -> (i32, i32) {
    %c0_i32 = arith.constant 0 : i32
    %c0_i32_0 = arith.constant 0 : i32
    %c0_i32_1 = arith.constant 0 : i32
    return %c0_i32, %c0_i32_0 : i32, i32
  }
  func.func @transform_2(%arg0: i32) -> (i32, i32) {
    %c0_i32 = arith.constant 0 : i32
    %c0_i32_0 = arith.constant 0 : i32
    %c0_i32_1 = arith.constant 0 : i32
    return %c0_i32, %c0_i32_0 : i32, i32
  }
  func.func @transform_3(%arg0: i32) -> (i32, i32) {
    %c0_i32 = arith.constant 0 : i32
    %c0_i32_0 = arith.constant 0 : i32
    %c0_i32_1 = arith.constant 0 : i32
    return %c0_i32, %c0_i32_0 : i32, i32
  }
  func.func @transform_4(%arg0: i32) -> (i32, i32) {
    %c0_i32 = arith.constant 0 : i32
    %c0_i32_0 = arith.constant 0 : i32
    %c0_i32_1 = arith.constant 0 : i32
    return %c0_i32, %c0_i32_0 : i32, i32
  }
  func.func @transform_5(%arg0: i32) -> (i32, i32) {
    %c0_i32 = arith.constant 0 : i32
    %c0_i32_0 = arith.constant 0 : i32
    return %arg0, %c0_i32 : i32, i32
  }
}

</mosaic_0001>

<llo_original>
// kernel: tpu_custom_call.1
$region0: #{tpu_custom_call.1}
  #allocation0 [shape = 'u32[]', space=smem, size = 0x4, offset = 0x4, fixed_abs, tag = 'smem constant byte address 0x4 - core index']
  #allocation1 [shape = 'u32[144,128]{1,0:T(1,128)}', space=vmem, size = 0x12000, scoped, tag = 'internal scratch']
  %s0 = inlined_call_operand.hbm [shape: f32[8,128], index: 0, kind: input, shape index: {}]
  %s1 = inlined_call_operand.hbm [shape: bf16[128,128], index: 1, kind: input, shape index: {}]
  %s2 = inlined_call_operand.vmem [shape: f32[1,128], index: 2, kind: input, shape index: {}]
  %s3 = inlined_call_operand.hbm [shape: bf16[128,128], index: 3, kind: input, shape index: {}]
  %s4 = inlined_call_operand.vmem [shape: f32[1,128], index: 4, kind: input, shape index: {}]
  %s5 = inlined_call_operand.hbm [shape: f32[8,128], index: 5, kind: output, shape index: {}]
  %s6 = sld [smem:[#allocation0]]
  $region42: #{tpu_custom_call.1} parent=0
    _
  %s8 = ssub.s32 1, %s6
  %s9 = scalar_select 0, %s8, %s6
  $region1: #{tpu_custom_call.1} parent=0
    #allocation2 [shape = 'u8[4096]{0}', space=vmem, size = 0x1000, scoped, tag = 'input window, operand 0, single buffered']
    #allocation3 [shape = 's32[1]{0}', space=sflag, size = 0x4, scoped, tag = 'scoped memory for tpu_custom_call.1']
    #allocation4 [shape = 's32[1]{0}', space=sflag, size = 0x4, scoped, tag = 'scoped memory for tpu_custom_call.1']
    #allocation5 [shape = 'u8[32768]{0}', space=vmem, size = 0x8000, scoped, tag = 'input window, operand 1, single buffered']
    #allocation6 [shape = 's32[1]{0}', space=sflag, size = 0x4, scoped, tag = 'scoped memory for tpu_custom_call.1']
    #allocation7 [shape = 'u8[32768]{0}', space=vmem, size = 0x8000, scoped, tag = 'input window, operand 3, single buffered']
    #allocation8 [shape = 'u8[4096]{0}', space=vmem, size = 0x1000, scoped, tag = 'output window, operand 0, single buffered']
    %10 = vsyncpa [#allocation3], 0
    %11 = vsyncpa [#allocation6], 0
    %12 = vsyncpa [#allocation4], 0
    // Predicated region
    $region2: #{tpu_custom_call.1} parent=1 // pred_check
      _
    $region3: #{tpu_custom_call.1} parent=1 // pred_check_branch
      %14 = sbr.rel (0) target = $region5
    $region4: #{tpu_custom_call.1} parent=1 // pred_region
      %s16 = ssub.s32 128, 128
      %17 = vsyncadd [#allocation3], %s16
      %s19 = sshll.u32 [#allocation2], 4
      %s20 = int_to_ptr.vmem [resolvable:$true] %s19
      %22 = dma.hbm_to_vmem [thread:$0]  %s0, 128, %s20, [#allocation3]
    $region5: #{tpu_custom_call.1} parent=1 // pred_fallthru
      _
    // Predicated region
    $region6: #{tpu_custom_call.1} parent=1 // pred_check
      _
    $region7: #{tpu_custom_call.1} parent=1 // pred_check_branch
      %24 = sbr.rel (0) target = $region9
    $region8: #{tpu_custom_call.1} parent=1 // pred_region
      %s26 = ssub.s32 1024, 1024
      %27 = vsyncadd [#allocation6], %s26
      %s28 = sshll.u32 [#allocation5], 4
      %s29 = int_to_ptr.vmem [resolvable:$true] %s28
      %34 = dma.hbm_to_vmem [thread:$0]  %s1, 1024, %s29, [#allocation6], 64, 64, 4
    $region9: #{tpu_custom_call.1} parent=1 // pred_fallthru
      _
    // Predicated region
    $region10: #{tpu_custom_call.1} parent=1 // pred_check
      _
    $region11: #{tpu_custom_call.1} parent=1 // pred_check_branch
      %36 = sbr.rel (0) target = $region13
    $region12: #{tpu_custom_call.1} parent=1 // pred_region
      _
    $region13: #{tpu_custom_call.1} parent=1 // pred_fallthru
      _
    // Predicated region
    $region14: #{tpu_custom_call.1} parent=1 // pred_check
      _
    $region15: #{tpu_custom_call.1} parent=1 // pred_check_branch
      %38 = sbr.rel (0) target = $region17
    $region16: #{tpu_custom_call.1} parent=1 // pred_region
      %s40 = ssub.s32 1024, 1024
      %41 = vsyncadd [#allocation6], %s40
      %s42 = sshll.u32 [#allocation7], 4
      %s43 = int_to_ptr.vmem [resolvable:$true] %s42
      %48 = dma.hbm_to_vmem [thread:$0]  %s3, 1024, %s43, [#allocation6], 64, 64, 4
    $region17: #{tpu_custom_call.1} parent=1 // pred_fallthru
      _
    // Predicated region
    $region18: #{tpu_custom_call.1} parent=1 // pred_check
      _
    $region19: #{tpu_custom_call.1} parent=1 // pred_check_branch
      %50 = sbr.rel (0) target = $region21
    $region20: #{tpu_custom_call.1} parent=1 // pred_region
      _
    $region21: #{tpu_custom_call.1} parent=1 // pred_fallthru
      _
    // Predicated region
    $region22: #{tpu_custom_call.1} parent=1 // pred_check
      _
    $region23: #{tpu_custom_call.1} parent=1 // pred_check_branch
      %52 = sbr.rel (0) target = $region25
    $region24: #{tpu_custom_call.1} parent=1 // pred_region
      %53 = dma.done [#allocation3], 128
    $region25: #{tpu_custom_call.1} parent=1 // pred_fallthru
      _
    // Predicated region
    $region26: #{tpu_custom_call.1} parent=1 // pred_check
      _
    $region27: #{tpu_custom_call.1} parent=1 // pred_check_branch
      %55 = sbr.rel (0) target = $region29
    $region28: #{tpu_custom_call.1} parent=1 // pred_region
      %56 = dma.done [#allocation6], 1024
    $region29: #{tpu_custom_call.1} parent=1 // pred_fallthru
      _
    // Predicated region
    $region30: #{tpu_custom_call.1} parent=1 // pred_check
      _
    $region31: #{tpu_custom_call.1} parent=1 // pred_check_branch
      %58 = sbr.rel (0) target = $region33
    $region32: #{tpu_custom_call.1} parent=1 // pred_region
      %59 = dma.done [#allocation6], 1024
    $region33: #{tpu_custom_call.1} parent=1 // pred_fallthru
      _
    %v61 = vld [vmem:[#allocation2] sm:$0xff]
    %v62 = vpack.c.bf16 %v61, %v61
    %v63 = vld [vmem:[#allocation5] sm:$0xf]
    %v64 = vld [vmem:[#allocation5 + $0x4] sm:$0xf]
    %v65 = vld [vmem:[#allocation5 + $0x8] sm:$0xf]
    %v66 = vld [vmem:[#allocation5 + $0xc] sm:$0xf]
    %v67 = vld [vmem:[#allocation5 + $0x10] sm:$0xf]
    %v68 = vld [vmem:[#allocation5 + $0x14] sm:$0xf]
    %v69 = vld [vmem:[#allocation5 + $0x18] sm:$0xf]
    %v70 = vld [vmem:[#allocation5 + $0x1c] sm:$0xf]
    %v71 = vld [vmem:[#allocation5 + $0x20] sm:$0xf]
    %v72 = vld [vmem:[#allocation5 + $0x24] sm:$0xf]
    %v73 = vld [vmem:[#allocation5 + $0x28] sm:$0xf]
    %v74 = vld [vmem:[#allocation5 + $0x2c] sm:$0xf]
    %v75 = vld [vmem:[#allocation5 + $0x30] sm:$0xf]
    %v76 = vld [vmem:[#allocation5 + $0x34] sm:$0xf]
    %v77 = vld [vmem:[#allocation5 + $0x38] sm:$0xf]
    %v78 = vld [vmem:[#allocation5 + $0x3c] sm:$0xf]
    %v79 = vld [vmem:[%s2] sm:$0x1]
    %v81 = vlaneseq
    %v82 = vshrl.u32 %v81, 7
    %v83 = vsub.s32 0, %v82
    %v84 = vrot.slane %v79, %v83
    %v102 = vunpack.c.l.b16 %v63
    %v103 = vunpack.c.l.b16 %v64
    %v104 = vunpack.c.l.b16 %v65
    %v105 = vunpack.c.l.b16 %v66
    %v106 = vunpack.c.l.b16 %v67
    %v107 = vunpack.c.l.b16 %v68
    %v108 = vunpack.c.l.b16 %v69
    %v109 = vunpack.c.l.b16 %v70
    %v110 = vunpack.c.l.b16 %v71
    %v111 = vunpack.c.l.b16 %v72
    %v112 = vunpack.c.l.b16 %v73
    %v113 = vunpack.c.l.b16 %v74
    %v114 = vunpack.c.l.b16 %v75
    %v115 = vunpack.c.l.b16 %v76
    %v116 = vunpack.c.l.b16 %v77
    %v117 = vunpack.c.l.b16 %v78
    %v118 = vpack.c.b16 %v103, %v102
    %v119 = vpack.c.b16 %v105, %v104
    %v120 = vpack.c.b16 %v107, %v106
    %v121 = vpack.c.b16 %v109, %v108
    %v122 = vpack.c.b16 %v111, %v110
    %v123 = vpack.c.b16 %v113, %v112
    %v124 = vpack.c.b16 %v115, %v114
    %v125 = vpack.c.b16 %v117, %v116
    %134 = vmatprep.subr.bf16.mxu0 0
    %135 = vmatpush1.bf16.msra.mxu0 %v118
    %136 = vmatprep.subr.bf16.mxu0 0
    %137 = vmatpush1.bf16.msra.mxu0 %v119
    %138 = vmatprep.subr.bf16.mxu0 0
    %139 = vmatpush1.bf16.msra.mxu0 %v120
    %140 = vmatprep.subr.bf16.mxu0 0
    %141 = vmatpush1.bf16.msra.mxu0 %v121
    %142 = vmatprep.subr.bf16.mxu0 0
    %143 = vmatpush1.bf16.msra.mxu0 %v122
    %144 = vmatprep.subr.bf16.mxu0 0
    %145 = vmatpush1.bf16.msra.mxu0 %v123
    %146 = vmatprep.subr.bf16.mxu0 0
    %147 = vmatpush1.bf16.msra.mxu0 %v124
    %148 = vmatprep.subr.bf16.mxu0 0
    %149 = vmatpush1.bf16.msra.mxu0 %v125
    %150 = vmatprep.subr.bf16.mxu0 0
    %151 = vmatpush1.bf16.msra.mxu0 0
    %152 = vmatprep.subr.bf16.mxu0 0
    %153 = vmatpush1.bf16.msra.mxu0 0
    %154 = vmatprep.subr.bf16.mxu0 0
    %155 = vmatpush1.bf16.msra.mxu0 0
    %156 = vmatprep.subr.bf16.mxu0 0
    %157 = vmatpush1.bf16.msra.mxu0 0
    %158 = vmatprep.subr.bf16.mxu0 0
    %159 = vmatpush1.bf16.msra.mxu0 0
    %160 = vmatprep.subr.bf16.mxu0 0
    %161 = vmatpush1.bf16.msra.mxu0 0
    %162 = vmatprep.subr.bf16.mxu0 0
    %163 = vmatpush1.bf16.msra.mxu0 0
    %164 = vmatprep.subr.bf16.mxu0 0
    %165 = vmatpush1.bf16.msra.mxu0 0
    %166 = vmatprep.mubr.bf16.mxu0 0
    %167 = vmatmul.mubr.bf16.gmra.mrb[0].mxu0 %v62
    %v168 = vpop.f32.mrb[0].mxu0
    %v169 = vadd.f32 %v84, %v168
    %v170 = vpop.f32.mrb[0].mxu0
    %v171 = vpop.f32.mrb[0].mxu0
    %v172 = vpop.f32.mrb[0].mxu0
    %173 = vdwg.mxu0
    %v174 = vtanh.pop %v169
    %v175 = vpack.c.bf16 %v174, %v174
    %v176 = vld [vmem:[#allocation7] sm:$0xf]
    %v177 = vld [vmem:[#allocation7 + $0x4] sm:$0xf]
    %v178 = vld [vmem:[#allocation7 + $0x8] sm:$0xf]
    %v179 = vld [vmem:[#allocation7 + $0xc] sm:$0xf]
    %v180 = vld [vmem:[#allocation7 + $0x10] sm:$0xf]
    %v181 = vld [vmem:[#allocation7 + $0x14] sm:$0xf]
    %v182 = vld [vmem:[#allocation7 + $0x18] sm:$0xf]
    %v183 = vld [vmem:[#allocation7 + $0x1c] sm:$0xf]
    %v184 = vld [vmem:[#allocation7 + $0x20] sm:$0xf]
    %v185 = vld [vmem:[#allocation7 + $0x24] sm:$0xf]
    %v186 = vld [vmem:[#allocation7 + $0x28] sm:$0xf]
    %v187 = vld [vmem:[#allocation7 + $0x2c] sm:$0xf]
    %v188 = vld [vmem:[#allocation7 + $0x30] sm:$0xf]
    %v189 = vld [vmem:[#allocation7 + $0x34] sm:$0xf]
    %v190 = vld [vmem:[#allocation7 + $0x38] sm:$0xf]
    %v191 = vld [vmem:[#allocation7 + $0x3c] sm:$0xf]
    %v192 = vld [vmem:[%s4] sm:$0x1]
    %v194 = vlaneseq
    %v195 = vshrl.u32 %v194, 7
    %v196 = vsub.s32 0, %v195
    %v197 = vrot.slane %v192, %v196
    %v215 = vunpack.c.l.b16 %v176
    %v216 = vunpack.c.l.b16 %v177
    %v217 = vunpack.c.l.b16 %v178
    %v218 = vunpack.c.l.b16 %v179
    %v219 = vunpack.c.l.b16 %v180
    %v220 = vunpack.c.l.b16 %v181
    %v221 = vunpack.c.l.b16 %v182
    %v222 = vunpack.c.l.b16 %v183
    %v223 = vunpack.c.l.b16 %v184
    %v224 = vunpack.c.l.b16 %v185
    %v225 = vunpack.c.l.b16 %v186
    %v226 = vunpack.c.l.b16 %v187
    %v227 = vunpack.c.l.b16 %v188
    %v228 = vunpack.c.l.b16 %v189
    %v229 = vunpack.c.l.b16 %v190
    %v230 = vunpack.c.l.b16 %v191
    %v231 = vpack.c.b16 %v216, %v215
    %v232 = vpack.c.b16 %v218, %v217
    %v233 = vpack.c.b16 %v220, %v219
    %v234 = vpack.c.b16 %v222, %v221
    %v235 = vpack.c.b16 %v224, %v223
    %v236 = vpack.c.b16 %v226, %v225
    %v237 = vpack.c.b16 %v228, %v227
    %v238 = vpack.c.b16 %v230, %v229
    %247 = vmatprep.subr.bf16.mxu0 0
    %248 = vmatpush1.bf16.msra.mxu0 %v231
    %249 = vmatprep.subr.bf16.mxu0 0
    %250 = vmatpush1.bf16.msra.mxu0 %v232
    %251 = vmatprep.subr.bf16.mxu0 0
    %252 = vmatpush1.bf16.msra.mxu0 %v233
    %253 = vmatprep.subr.bf16.mxu0 0
    %254 = vmatpush1.bf16.msra.mxu0 %v234
    %255 = vmatprep.subr.bf16.mxu0 0
    %256 = vmatpush1.bf16.msra.mxu0 %v235
    %257 = vmatprep.subr.bf16.mxu0 0
    %258 = vmatpush1.bf16.msra.mxu0 %v236
    %259 = vmatprep.subr.bf16.mxu0 0
    %260 = vmatpush1.bf16.msra.mxu0 %v237
    %261 = vmatprep.subr.bf16.mxu0 0
    %262 = vmatpush1.bf16.msra.mxu0 %v238
    %263 = vmatprep.subr.bf16.mxu0 0
    %264 = vmatpush1.bf16.msra.mxu0 0
    %265 = vmatprep.subr.bf16.mxu0 0
    %266 = vmatpush1.bf16.msra.mxu0 0
    %267 = vmatprep.subr.bf16.mxu0 0
    %268 = vmatpush1.bf16.msra.mxu0 0
    %269 = vmatprep.subr.bf16.mxu0 0
    %270 = vmatpush1.bf16.msra.mxu0 0
    %271 = vmatprep.subr.bf16.mxu0 0
    %272 = vmatpush1.bf16.msra.mxu0 0
    %273 = vmatprep.subr.bf16.mxu0 0
    %274 = vmatpush1.bf16.msra.mxu0 0
    %275 = vmatprep.subr.bf16.mxu0 0
    %276 = vmatpush1.bf16.msra.mxu0 0
    %277 = vmatprep.subr.bf16.mxu0 0
    %278 = vmatpush1.bf16.msra.mxu0 0
    %279 = vmatprep.mubr.bf16.mxu0 0
    %280 = vmatmul.mubr.bf16.gmra.mrb[0].mxu0 %v175
    %v281 = vpop.f32.mrb[0].mxu0
    %v282 = vadd.f32 %v197, %v281
    %v283 = vpop.f32.mrb[0].mxu0
    %v284 = vpop.f32.mrb[0].mxu0
    %v285 = vpop.f32.mrb[0].mxu0
    %286 = vdwg.mxu0
    %287 = vst [vmem:[#allocation8] sm:$0xff] %v282
    // Predicated region
    $region34: #{tpu_custom_call.1} parent=1 // pred_check
      _
    $region35: #{tpu_custom_call.1} parent=1 // pred_check_branch
      %289 = sbr.rel (0) target = $region37
    $region36: #{tpu_custom_call.1} parent=1 // pred_region
      %s291 = ssub.s32 128, 128
      %292 = vsyncadd [#allocation4], %s291
      %s294 = sshll.u32 [#allocation8], 4
      %s295 = int_to_ptr.vmem [resolvable:$true] %s294
      %297 = dma.vmem_to_hbm [thread:$0]  %s295, 128, %s5, [#allocation4]
    $region37: #{tpu_custom_call.1} parent=1 // pred_fallthru
      _
    // Predicated region
    $region38: #{tpu_custom_call.1} parent=1 // pred_check
      _
    $region39: #{tpu_custom_call.1} parent=1 // pred_check_branch
      %299 = sbr.rel (0) target = $region41
    $region40: #{tpu_custom_call.1} parent=1 // pred_region
      %300 = dma.done [#allocation4], 128
    $region41: #{tpu_custom_call.1} parent=1 // pred_fallthru
      _
    %301 = vsyncpa [#allocation3], 1
    %302 = vsyncpa [#allocation6], 1
    %303 = vsyncpa [#allocation4], 1

// kernel: tpu_custom_call.1
$region0: #{tpu_custom_call.1}
  #allocation0 [shape = 'u32[]', space=smem, size = 0x4, offset = 0x4, fixed_abs, tag = 'smem constant byte address 0x4 - core index']
  #allocation1 [shape = 'u32[144,128]{1,0:T(1,128)}', space=vmem, size = 0x12000, scoped, tag = 'internal scratch']
  %s0 = inlined_call_operand.hbm [shape: f32[8,128], index: 0, kind: input, shape index: {}]
  %s1 = inlined_call_operand.hbm [shape: bf16[128,128], index: 1, kind: input, shape index: {}]
  %s2 = inlined_call_operand.vmem [shape: f32[1,128], index: 2, kind: input, shape index: {}]
  %s3 = inlined_call_operand.hbm [shape: bf16[128,128], index: 3, kind: input, shape index: {}]
  %s4 = inlined_call_operand.vmem [shape: f32[1,128], index: 4, kind: input, shape index: {}]
  %s5 = inlined_call_operand.hbm [shape: f32[8,128], index: 5, kind: output, shape index: {}]
  %s6 = sld [smem:[#allocation0]]
  $region42: #{tpu_custom_call.1} parent=0
    _
  %s8 = ssub.s32 1, %s6
  %s9 = scalar_select 0, %s8, %s6
  $region1: #{tpu_custom_call.1} parent=0
    #allocation2 [shape = 'u8[4096]{0}', space=vmem, size = 0x1000, scoped, tag = 'input window, operand 0, single buffered']
    #allocation3 [shape = 's32[1]{0}', space=sflag, size = 0x4, scoped, tag = 'scoped memory for tpu_custom_call.1']
    #allocation4 [shape = 's32[1]{0}', space=sflag, size = 0x4, scoped, tag = 'scoped memory for tpu_custom_call.1']
    #allocation5 [shape = 'u8[32768]{0}', space=vmem, size = 0x8000, scoped, tag = 'input window, operand 1, single buffered']
    #allocation6 [shape = 's32[1]{0}', space=sflag, size = 0x4, scoped, tag = 'scoped memory for tpu_custom_call.1']
    #allocation7 [shape = 'u8[32768]{0}', space=vmem, size = 0x8000, scoped, tag = 'input window, operand 3, single buffered']
    #allocation8 [shape = 'u8[4096]{0}', space=vmem, size = 0x1000, scoped, tag = 'output window, operand 0, single buffered']
    %10 = vsyncpa [#allocation3], 0
    %11 = vsyncpa [#allocation6], 0
    %12 = vsyncpa [#allocation4], 0
    // Predicated region
    $region2: #{tpu_custom_call.1} parent=1 // pred_check
      _
    $region3: #{tpu_custom_call.1} parent=1 // pred_check_branch
      %14 = sbr.rel (0) target = $region5
    $region4: #{tpu_custom_call.1} parent=1 // pred_region
      %s16 = ssub.s32 128, 128
      %17 = vsyncadd [#allocation3], %s16
      %s19 = sshll.u32 [#allocation2], 4
      %s20 = int_to_ptr.vmem [resolvable:$true] %s19
      %22 = dma.hbm_to_vmem [thread:$0]  %s0, 128, %s20, [#allocation3]
    $region5: #{tpu_custom_call.1} parent=1 // pred_fallthru
      _
    // Predicated region
    $region6: #{tpu_custom_call.1} parent=1 // pred_check
      _
    $region7: #{tpu_custom_call.1} parent=1 // pred_check_branch
      %24 = sbr.rel (0) target = $region9
    $region8: #{tpu_custom_call.1} parent=1 // pred_region
      %s26 = ssub.s32 1024, 1024
      %27 = vsyncadd [#allocation6], %s26
      %s28 = sshll.u32 [#allocation5], 4
      %s29 = int_to_ptr.vmem [resolvable:$true] %s28
      %34 = dma.hbm_to_vmem [thread:$0]  %s1, 1024, %s29, [#allocation6], 64, 64, 4
    $region9: #{tpu_custom_call.1} parent=1 // pred_fallthru
      _
    // Predicated region
    $region10: #{tpu_custom_call.1} parent=1 // pred_check
      _
    $region11: #{tpu_custom_call.1} parent=1 // pred_check_branch
      %36 = sbr.rel (0) target = $region13
    $region12: #{tpu_custom_call.1} parent=1 // pred_region
      _
    $region13: #{tpu_custom_call.1} parent=1 // pred_fallthru
      _
    // Predicated region
    $region14: #{tpu_custom_call.1} parent=1 // pred_check
      _
    $region15: #{tpu_custom_call.1} parent=1 // pred_check_branch
      %38 = sbr.rel (0) target = $region17
    $region16: #{tpu_custom_call.1} parent=1 // pred_region
      %s40 = ssub.s32 1024, 1024
      %41 = vsyncadd [#allocation6], %s40
      %s42 = sshll.u32 [#allocation7], 4
      %s43 = int_to_ptr.vmem [resolvable:$true] %s42
      %48 = dma.hbm_to_vmem [thread:$0]  %s3, 1024, %s43, [#allocation6], 64, 64, 4
    $region17: #{tpu_custom_call.1} parent=1 // pred_fallthru
      _
    // Predicated region
    $region18: #{tpu_custom_call.1} parent=1 // pred_check
      _
    $region19: #{tpu_custom_call.1} parent=1 // pred_check_branch
      %50 = sbr.rel (0) target = $region21
    $region20: #{tpu_custom_call.1} parent=1 // pred_region
      _
    $region21: #{tpu_custom_call.1} parent=1 // pred_fallthru
      _
    // Predicated region
    $region22: #{tpu_custom_call.1} parent=1 // pred_check
      _
    $region23: #{tpu_custom_call.1} parent=1 // pred_check_branch
      %52 = sbr.rel (0) target = $region25
    $region24: #{tpu_custom_call.1} parent=1 // pred_region
      %53 = dma.done [#allocation3], 128
    $region25: #{tpu_custom_call.1} parent=1 // pred_fallthru
      _
    // Predicated region
    $region26: #{tpu_custom_call.1} parent=1 // pred_check
      _
    $region27: #{tpu_custom_call.1} parent=1 // pred_check_branch
      %55 = sbr.rel (0) target = $region29
    $region28: #{tpu_custom_call.1} parent=1 // pred_region
      %56 = dma.done [#allocation6], 1024
    $region29: #{tpu_custom_call.1} parent=1 // pred_fallthru
      _
    // Predicated region
    $region30: #{tpu_custom_call.1} parent=1 // pred_check
      _
    $region31: #{tpu_custom_call.1} parent=1 // pred_check_branch
      %58 = sbr.rel (0) target = $region33
    $region32: #{tpu_custom_call.1} parent=1 // pred_region
      %59 = dma.done [#allocation6], 1024
    $region33: #{tpu_custom_call.1} parent=1 // pred_fallthru
      _
    %v61 = vld [vmem:[#allocation2] sm:$0xff]
    %v62 = vpack.c.bf16 %v61, %v61
    %v63 = vld [vmem:[#allocation5] sm:$0xf]
    %v64 = vld [vmem:[#allocation5 + $0x4] sm:$0xf]
    %v65 = vld [vmem:[#allocation5 + $0x8] sm:$0xf]
    %v66 = vld [vmem:[#allocation5 + $0xc] sm:$0xf]
    %v67 = vld [vmem:[#allocation5 + $0x10] sm:$0xf]
    %v68 = vld [vmem:[#allocation5 + $0x14] sm:$0xf]
    %v69 = vld [vmem:[#allocation5 + $0x18] sm:$0xf]
    %v70 = vld [vmem:[#allocation5 + $0x1c] sm:$0xf]
    %v71 = vld [vmem:[#allocation5 + $0x20] sm:$0xf]
    %v72 = vld [vmem:[#allocation5 + $0x24] sm:$0xf]
    %v73 = vld [vmem:[#allocation5 + $0x28] sm:$0xf]
    %v74 = vld [vmem:[#allocation5 + $0x2c] sm:$0xf]
    %v75 = vld [vmem:[#allocation5 + $0x30] sm:$0xf]
    %v76 = vld [vmem:[#allocation5 + $0x34] sm:$0xf]
    %v77 = vld [vmem:[#allocation5 + $0x38] sm:$0xf]
    %v78 = vld [vmem:[#allocation5 + $0x3c] sm:$0xf]
    %v79 = vld [vmem:[%s2] sm:$0x1]
    %v81 = vlaneseq
    %v82 = vshrl.u32 %v81, 7
    %v83 = vsub.s32 0, %v82
    %v84 = vrot.slane %v79, %v83
    %v102 = vunpack.c.l.b16 %v63
    %v103 = vunpack.c.l.b16 %v64
    %v104 = vunpack.c.l.b16 %v65
    %v105 = vunpack.c.l.b16 %v66
    %v106 = vunpack.c.l.b16 %v67
    %v107 = vunpack.c.l.b16 %v68
    %v108 = vunpack.c.l.b16 %v69
    %v109 = vunpack.c.l.b16 %v70
    %v110 = vunpack.c.l.b16 %v71
    %v111 = vunpack.c.l.b16 %v72
    %v112 = vunpack.c.l.b16 %v73
    %v113 = vunpack.c.l.b16 %v74
    %v114 = vunpack.c.l.b16 %v75
    %v115 = vunpack.c.l.b16 %v76
    %v116 = vunpack.c.l.b16 %v77
    %v117 = vunpack.c.l.b16 %v78
    %v118 = vpack.c.b16 %v103, %v102
    %v119 = vpack.c.b16 %v105, %v104
    %v120 = vpack.c.b16 %v107, %v106
    %v121 = vpack.c.b16 %v109, %v108
    %v122 = vpack.c.b16 %v111, %v110
    %v123 = vpack.c.b16 %v113, %v112
    %v124 = vpack.c.b16 %v115, %v114
    %v125 = vpack.c.b16 %v117, %v116
    %134 = vmatprep.subr.bf16.mxu0 0
    %135 = vmatpush1.bf16.msra.mxu0 %v118
    %136 = vmatprep.subr.bf16.mxu0 0
    %137 = vmatpush1.bf16.msra.mxu0 %v119
    %138 = vmatprep.subr.bf16.mxu0 0
    %139 = vmatpush1.bf16.msra.mxu0 %v120
    %140 = vmatprep.subr.bf16.mxu0 0
    %141 = vmatpush1.bf16.msra.mxu0 %v121
    %142 = vmatprep.subr.bf16.mxu0 0
    %143 = vmatpush1.bf16.msra.mxu0 %v122
    %144 = vmatprep.subr.bf16.mxu0 0
    %145 = vmatpush1.bf16.msra.mxu0 %v123
    %146 = vmatprep.subr.bf16.mxu0 0
    %147 = vmatpush1.bf16.msra.mxu0 %v124
    %148 = vmatprep.subr.bf16.mxu0 0
    %149 = vmatpush1.bf16.msra.mxu0 %v125
    %150 = vmatprep.subr.bf16.mxu0 0
    %151 = vmatpush1.bf16.msra.mxu0 0
    %152 = vmatprep.subr.bf16.mxu0 0
    %153 = vmatpush1.bf16.msra.mxu0 0
    %154 = vmatprep.subr.bf16.mxu0 0
    %155 = vmatpush1.bf16.msra.mxu0 0
    %156 = vmatprep.subr.bf16.mxu0 0
    %157 = vmatpush1.bf16.msra.mxu0 0
    %158 = vmatprep.subr.bf16.mxu0 0
    %159 = vmatpush1.bf16.msra.mxu0 0
    %160 = vmatprep.subr.bf16.mxu0 0
    %161 = vmatpush1.bf16.msra.mxu0 0
    %162 = vmatprep.subr.bf16.mxu0 0
    %163 = vmatpush1.bf16.msra.mxu0 0
    %164 = vmatprep.subr.bf16.mxu0 0
    %165 = vmatpush1.bf16.msra.mxu0 0
    %166 = vmatprep.mubr.bf16.mxu0 0
    %167 = vmatmul.mubr.bf16.gmra.mrb[0].mxu0 %v62
    %v168 = vpop.f32.mrb[0].mxu0
    %v169 = vadd.f32 %v84, %v168
    %v170 = vpop.f32.mrb[0].mxu0
    %v171 = vpop.f32.mrb[0].mxu0
    %v172 = vpop.f32.mrb[0].mxu0
    %173 = vdwg.mxu0
    %v174 = vtanh.pop %v169
    %v175 = vpack.c.bf16 %v174, %v174
    %v176 = vld [vmem:[#allocation7] sm:$0xf]
    %v177 = vld [vmem:[#allocation7 + $0x4] sm:$0xf]
    %v178 = vld [vmem:[#allocation7 + $0x8] sm:$0xf]
    %v179 = vld [vmem:[#allocation7 + $0xc] sm:$0xf]
    %v180 = vld [vmem:[#allocation7 + $0x10] sm:$0xf]
    %v181 = vld [vmem:[#allocation7 + $0x14] sm:$0xf]
    %v182 = vld [vmem:[#allocation7 + $0x18] sm:$0xf]
    %v183 = vld [vmem:[#allocation7 + $0x1c] sm:$0xf]
    %v184 = vld [vmem:[#allocation7 + $0x20] sm:$0xf]
    %v185 = vld [vmem:[#allocation7 + $0x24] sm:$0xf]
    %v186 = vld [vmem:[#allocation7 + $0x28] sm:$0xf]
    %v187 = vld [vmem:[#allocation7 + $0x2c] sm:$0xf]
    %v188 = vld [vmem:[#allocation7 + $0x30] sm:$0xf]
    %v189 = vld [vmem:[#allocation7 + $0x34] sm:$0xf]
    %v190 = vld [vmem:[#allocation7 + $0x38] sm:$0xf]
    %v191 = vld [vmem:[#allocation7 + $0x3c] sm:$0xf]
    %v192 = vld [vmem:[%s4] sm:$0x1]
    %v194 = vlaneseq
    %v195 = vshrl.u32 %v194, 7
    %v196 = vsub.s32 0, %v195
    %v197 = vrot.slane %v192, %v196
    %v215 = vunpack.c.l.b16 %v176
    %v216 = vunpack.c.l.b16 %v177
    %v217 = vunpack.c.l.b16 %v178
    %v218 = vunpack.c.l.b16 %v179
    %v219 = vunpack.c.l.b16 %v180
    %v220 = vunpack.c.l.b16 %v181
    %v221 = vunpack.c.l.b16 %v182
    %v222 = vunpack.c.l.b16 %v183
    %v223 = vunpack.c.l.b16 %v184
    %v224 = vunpack.c.l.b16 %v185
    %v225 = vunpack.c.l.b16 %v186
    %v226 = vunpack.c.l.b16 %v187
    %v227 = vunpack.c.l.b16 %v188
    %v228 = vunpack.c.l.b16 %v189
    %v229 = vunpack.c.l.b16 %v190
    %v230 = vunpack.c.l.b16 %v191
    %v231 = vpack.c.b16 %v216, %v215
    %v232 = vpack.c.b16 %v218, %v217
    %v233 = vpack.c.b16 %v220, %v219
    %v234 = vpack.c.b16 %v222, %v221
    %v235 = vpack.c.b16 %v224, %v223
    %v236 = vpack.c.b16 %v226, %v225
    %v237 = vpack.c.b16 %v228, %v227
    %v238 = vpack.c.b16 %v230, %v229
    %247 = vmatprep.subr.bf16.mxu0 0
    %248 = vmatpush1.bf16.msra.mxu0 %v231
    %249 = vmatprep.subr.bf16.mxu0 0
    %250 = vmatpush1.bf16.msra.mxu0 %v232
    %251 = vmatprep.subr.bf16.mxu0 0
    %252 = vmatpush1.bf16.msra.mxu0 %v233
    %253 = vmatprep.subr.bf16.mxu0 0
    %254 = vmatpush1.bf16.msra.mxu0 %v234
    %255 = vmatprep.subr.bf16.mxu0 0
    %256 = vmatpush1.bf16.msra.mxu0 %v235
    %257 = vmatprep.subr.bf16.mxu0 0
    %258 = vmatpush1.bf16.msra.mxu0 %v236
    %259 = vmatprep.subr.bf16.mxu0 0
    %260 = vmatpush1.bf16.msra.mxu0 %v237
    %261 = vmatprep.subr.bf16.mxu0 0
    %262 = vmatpush1.bf16.msra.mxu0 %v238
    %263 = vmatprep.subr.bf16.mxu0 0
    %264 = vmatpush1.bf16.msra.mxu0 0
    %265 = vmatprep.subr.bf16.mxu0 0
    %266 = vmatpush1.bf16.msra.mxu0 0
    %267 = vmatprep.subr.bf16.mxu0 0
    %268 = vmatpush1.bf16.msra.mxu0 0
    %269 = vmatprep.subr.bf16.mxu0 0
    %270 = vmatpush1.bf16.msra.mxu0 0
    %271 = vmatprep.subr.bf16.mxu0 0
    %272 = vmatpush1.bf16.msra.mxu0 0
    %273 = vmatprep.subr.bf16.mxu0 0
    %274 = vmatpush1.bf16.msra.mxu0 0
    %275 = vmatprep.subr.bf16.mxu0 0
    %276 = vmatpush1.bf16.msra.mxu0 0
    %277 = vmatprep.subr.bf16.mxu0 0
    %278 = vmatpush1.bf16.msra.mxu0 0
    %279 = vmatprep.mubr.bf16.mxu0 0
    %280 = vmatmul.mubr.bf16.gmra.mrb[0].mxu0 %v175
    %v281 = vpop.f32.mrb[0].mxu0
    %v282 = vadd.f32 %v197, %v281
    %v283 = vpop.f32.mrb[0].mxu0
    %v284 = vpop.f32.mrb[0].mxu0
    %v285 = vpop.f32.mrb[0].mxu0
    %286 = vdwg.mxu0
    %287 = vst [vmem:[#allocation8] sm:$0xff] %v282
    // Predicated region
    $region34: #{tpu_custom_call.1} parent=1 // pred_check
      _
    $region35: #{tpu_custom_call.1} parent=1 // pred_check_branch
      %289 = sbr.rel (0) target = $region37
    $region36: #{tpu_custom_call.1} parent=1 // pred_region
      %s291 = ssub.s32 128, 128
      %292 = vsyncadd [#allocation4], %s291
      %s294 = sshll.u32 [#allocation8], 4
      %s295 = int_to_ptr.vmem [resolvable:$true] %s294
      %297 = dma.vmem_to_hbm [thread:$0]  %s295, 128, %s5, [#allocation4]
    $region37: #{tpu_custom_call.1} parent=1 // pred_fallthru
      _
    // Predicated region
    $region38: #{tpu_custom_call.1} parent=1 // pred_check
      _
    $region39: #{tpu_custom_call.1} parent=1 // pred_check_branch
      %299 = sbr.rel (0) target = $region41
    $region40: #{tpu_custom_call.1} parent=1 // pred_region
      %300 = dma.done [#allocation4], 128
    $region41: #{tpu_custom_call.1} parent=1 // pred_fallthru
      _
    %301 = vsyncpa [#allocation3], 1
    %302 = vsyncpa [#allocation6], 1
    %303 = vsyncpa [#allocation4], 1

</llo_original>
